<compile_context>
chip_gen: v6e
topology: v6e:2x2x1
jax: 0.10.0
libtpu: 0.0.40
codegen_flags: <defaults>
</compile_context>

<pallas_src>
import jax
import jax.numpy as jnp
from jax.experimental import pallas as pl
from jax.experimental.pallas import tpu as pltpu

EPS = 1e-5
_MiB = 1024 * 1024


def _bn_kernel(x_ref, gamma_ref, beta_ref, xbn_ref):
    # Training-mode BatchNorm1d with biased batch variance; two-pass
    # (centered) statistics in f32 to avoid catastrophic cancellation.
    x = x_ref[...].astype(jnp.float32)                       # [N, Din]
    inv_n = 1.0 / x.shape[0]
    mean = jnp.sum(x, axis=0, keepdims=True) * inv_n         # [1, Din]
    xc = x - mean
    var = jnp.sum(xc * xc, axis=0, keepdims=True) * inv_n    # biased variance
    s = gamma_ref[...] * jax.lax.rsqrt(var + EPS)            # [1, Din]
    # (x - mean) * s + beta, stored bf16 for the MXU (f32 accumulation later).
    xbn_ref[...] = (xc * s + beta_ref[...]).astype(xbn_ref.dtype)


def _linear_kernel(xbn_ref, w_ref, b_ref, o_ref):
    # y[n, o] = sum_d x_bn[n, d] * W_t[d, o] + b[o]
    # Both operands bf16, f32 accumulation on the MXU; bias added in f32.
    y = jnp.dot(xbn_ref[...], w_ref[...], preferred_element_type=jnp.float32)
    o_ref[...] = (y + b_ref[...]).astype(o_ref.dtype)


def prepare_params(gamma, beta, weight, bias, *, tn_max=512):
    """Init-time parameter prep (NOT on the per-call hot path):
    pad out_dim to a lane-dense multiple of 128, transpose the PyTorch
    [out_dim, in_dim] weight to [in_dim, out_pad], cast it to bf16 once,
    and pick the output-column tile width."""
    out_dim, in_dim = weight.shape
    out_pad = ((out_dim + 127) // 128) * 128
    if out_pad != out_dim:
        weight = jnp.pad(weight, ((0, out_pad - out_dim), (0, 0)))
        bias = jnp.pad(bias, (0, out_pad - out_dim))

    # Largest multiple of 128 (<= tn_max) that divides the padded out_dim.
    tn = 128
    for cand in (tn_max, 384, 256, 128):
        if cand <= tn_max and out_pad % cand == 0:
            tn = cand
            break

    return dict(
        gamma=gamma.reshape(1, in_dim).astype(jnp.float32),
        beta=beta.reshape(1, in_dim).astype(jnp.float32),
        weight_t=weight.T.astype(jnp.bfloat16),      # [in_dim, out_pad] bf16
        bias=bias.reshape(1, out_pad).astype(jnp.float32),
        out_dim=out_dim,
        tn=tn,
    )


def embedding_generator(x, params, *, trim_output=True):
    """x: [N, in_dim] (native dtype). params: from prepare_params().
    Returns [N, out_dim] float32 (bf16 output is a drop-in change if the
    consumer tolerates it -- halves writeback bytes for large N)."""
    n, in_dim = x.shape
    gamma, beta = params["gamma"], params["beta"]
    weight_t, bias = params["weight_t"], params["bias"]
    out_dim, tn = params["out_dim"], params["tn"]
    out_pad = weight_t.shape[1]

    # ---- Prologue: batch-norm the (resident) batch once -> bf16 x_bn. ------
    bn_bytes = 4 * (n * in_dim * 4 + n * in_dim * 2 + 2 * in_dim * 4)
    x_bn = pl.pallas_call(
        _bn_kernel,
        out_shape=jax.ShapeDtypeStruct((n, in_dim), jnp.bfloat16),
        grid_spec=pltpu.PrefetchScalarGridSpec(
            num_scalar_prefetch=0,
            grid=(1,),
            in_specs=[
                pl.BlockSpec((n, in_dim), lambda i: (0, 0)),   # x
                pl.BlockSpec((1, in_dim), lambda i: (0, 0)),   # gamma
                pl.BlockSpec((1, in_dim), lambda i: (0, 0)),   # beta
            ],
            out_specs=pl.BlockSpec((n, in_dim), lambda i: (0, 0)),
        ),
        compiler_params=pltpu.CompilerParams(
            dimension_semantics=("arbitrary",),
            vmem_limit_bytes=int(max(32 * _MiB, min(64 * _MiB, bn_bytes))),
        ),
    )(x, gamma, beta)

    # ---- Main: stream bf16 weight-column tiles; independent grid steps. ----
    # VMEM estimate: double-buffered x_bn/weight/bias/out tiles, 2x headroom.
    est = 2 * (n * in_dim * 2 + in_dim * tn * 2 + tn * 4 + n * tn * 4)
    vmem_limit = int(max(32 * _MiB, min(64 * _MiB, 2 * est)))
    out = pl.pallas_call(
        _linear_kernel,
        out_shape=jax.ShapeDtypeStruct((n, out_pad), jnp.float32),
        grid_spec=pltpu.PrefetchScalarGridSpec(
            num_scalar_prefetch=0,
            grid=(out_pad // tn,),
            in_specs=[
                pl.BlockSpec((n, in_dim), lambda j: (0, 0)),    # x_bn (resident)
                pl.BlockSpec((in_dim, tn), lambda j: (0, j)),   # bf16 weight cols (streamed)
                pl.BlockSpec((1, tn), lambda j: (0, j)),        # bias tile
            ],
            out_specs=pl.BlockSpec((n, tn), lambda j: (0, j)),
        ),
        compiler_params=pltpu.CompilerParams(
            # No cross-step dependency -> shardable across TensorCores (v7x).
            dimension_semantics=("parallel",),
            vmem_limit_bytes=vmem_limit,
        ),
    )(x_bn, weight_t, bias)

    if trim_output and out_pad != out_dim:
        # In production, keep the padded width downstream (or mask the last
        # tile's store in-kernel) to avoid this extra output copy.
        out = out[:, :out_dim]
    return out


def _reference(x, gamma, beta, weight, bias):
    x = x.astype(jnp.float32)
    mean = jnp.mean(x, axis=0, keepdims=True)
    var = jnp.mean((x - mean) ** 2, axis=0, keepdims=True)
    x_bn = (x - mean) / jnp.sqrt(var + EPS) * gamma[None, :] + beta[None, :]
    return x_bn @ weight.T.astype(jnp.float32) + bias[None, :]


if __name__ == "__main__":
    N, IN_DIM, OUT_DIM = 8, 32, 16

    key = jax.random.PRNGKey(0)
    k_x, k_g, k_b, k_w, k_bias = jax.random.split(key, 5)

    x = jax.random.normal(k_x, (N, IN_DIM), dtype=jnp.float32)
    # BatchNorm1d default init is gamma=1, beta=0; perturb deterministically so
    # the affine path is actually exercised.
    gamma = 1.0 + 0.1 * jax.random.normal(k_g, (IN_DIM,), dtype=jnp.float32)
    beta = 0.1 * jax.random.normal(k_b, (IN_DIM,), dtype=jnp.float32)
    weight = jax.random.normal(k_w, (OUT_DIM, IN_DIM), dtype=jnp.float32) / jnp.sqrt(IN_DIM)
    bias = 0.1 * jax.random.normal(k_bias, (OUT_DIM,), dtype=jnp.float32)

    params = prepare_params(gamma, beta, weight, bias)   # init-time, once
    out = embedding_generator(x, params)
    out = jax.block_until_ready(out)

    ref = _reference(x, gamma, beta, weight, bias)
    assert out.shape == (N, OUT_DIM)
    # MXU is fed bf16 (x_bn and weight) with f32 accumulation, so allow ~1e-2
    # relative deviation vs. the pure-f32 reference.
    assert jnp.allclose(out, ref, atol=2e-2, rtol=2e-2), "mismatch vs reference"

    print("KERNEL_OK")
</pallas_src>

<mosaic_0001>
module attributes {stable_mosaic.version = 11 : i64} {
  func.func @_bn_kernel(%arg0: i32, %arg1: memref<8x32xf32, #tpu.memory_space<vmem>>, %arg2: memref<1x32xf32, #tpu.memory_space<vmem>>, %arg3: memref<1x32xf32, #tpu.memory_space<vmem>>, %arg4: memref<8x32xbf16, #tpu.memory_space<vmem>>) attributes {dimension_semantics = [#tpu.dimension_semantics<arbitrary>], iteration_bounds = array<i64: 1>, scalar_prefetch = 0 : i64, scratch_operands = 0 : i64, tpu.core_type = #tpu.core_type<tc>, window_params = [{pipeline_mode = #tpu.pipeline_mode<synchronous>, transform_indices = @transform_0, window_bounds = array<i64: 8, 32>}, {pipeline_mode = #tpu.pipeline_mode<synchronous>, transform_indices = @transform_1, window_bounds = array<i64: 1, 32>}, {pipeline_mode = #tpu.pipeline_mode<synchronous>, transform_indices = @transform_2, window_bounds = array<i64: 1, 32>}, {pipeline_mode = #tpu.pipeline_mode<synchronous>, transform_indices = @transform_3, window_bounds = array<i64: 8, 32>}]} {
    %c0 = arith.constant 0 : index
    %c0_0 = arith.constant 0 : index
    %0 = vector.load %arg1[%c0, %c0_0] : memref<8x32xf32, #tpu.memory_space<vmem>>, vector<8x32xf32>
    %cst = arith.constant dense<0.000000e+00> : vector<32xf32>
    %1 = vector.multi_reduction <add>, %0, %cst [0] : vector<8x32xf32> to vector<32xf32>
    %2 = vector.shape_cast %1 : vector<32xf32> to vector<1x32xf32>
    %cst_1 = arith.constant 1.250000e-01 : f32
    %3 = vector.broadcast %cst_1 : f32 to vector<1x32xf32>
    %4 = arith.mulf %2, %3 : vector<1x32xf32>
    %5 = vector.broadcast %4 : vector<1x32xf32> to vector<8x32xf32>
    %6 = arith.subf %0, %5 : vector<8x32xf32>
    %7 = arith.mulf %6, %6 : vector<8x32xf32>
    %cst_2 = arith.constant dense<0.000000e+00> : vector<32xf32>
    %8 = vector.multi_reduction <add>, %7, %cst_2 [0] : vector<8x32xf32> to vector<32xf32>
    %9 = vector.shape_cast %8 : vector<32xf32> to vector<1x32xf32>
    %cst_3 = arith.constant 1.250000e-01 : f32
    %10 = vector.broadcast %cst_3 : f32 to vector<1x32xf32>
    %11 = arith.mulf %9, %10 : vector<1x32xf32>
    %c0_4 = arith.constant 0 : index
    %c0_5 = arith.constant 0 : index
    %12 = vector.load %arg2[%c0_4, %c0_5] : memref<1x32xf32, #tpu.memory_space<vmem>>, vector<1x32xf32>
    %cst_6 = arith.constant 9.99999974E-6 : f32
    %13 = vector.broadcast %cst_6 : f32 to vector<1x32xf32>
    %14 = arith.addf %11, %13 : vector<1x32xf32>
    %15 = math.rsqrt %14 : vector<1x32xf32>
    %16 = arith.mulf %12, %15 : vector<1x32xf32>
    %17 = vector.broadcast %16 : vector<1x32xf32> to vector<8x32xf32>
    %18 = arith.mulf %6, %17 : vector<8x32xf32>
    %c0_7 = arith.constant 0 : index
    %c0_8 = arith.constant 0 : index
    %19 = vector.load %arg3[%c0_7, %c0_8] : memref<1x32xf32, #tpu.memory_space<vmem>>, vector<1x32xf32>
    %20 = vector.broadcast %19 : vector<1x32xf32> to vector<8x32xf32>
    %21 = arith.addf %18, %20 : vector<8x32xf32>
    %22 = arith.truncf %21 : vector<8x32xf32> to vector<8x32xbf16>
    %c0_9 = arith.constant 0 : index
    %c0_10 = arith.constant 0 : index
    %23 = vector.load %arg4[%c0_9, %c0_10] : memref<8x32xbf16, #tpu.memory_space<vmem>>, vector<8x32xbf16>
    tpu.vector_store %arg4[%c0_9, %c0_10], %22 {strides = array<i32>} : memref<8x32xbf16, #tpu.memory_space<vmem>>, vector<8x32xbf16>,
    return
  }
  func.func @transform_0(%arg0: i32) -> (i32, i32) {
    %c0_i32 = arith.constant 0 : i32
    %c0_i32_0 = arith.constant 0 : i32
    %c0_i32_1 = arith.constant 0 : i32
    return %c0_i32, %c0_i32_0 : i32, i32
  }
  func.func @transform_1(%arg0: i32) -> (i32, i32) {
    %c0_i32 = arith.constant 0 : i32
    %c0_i32_0 = arith.constant 0 : i32
    %c0_i32_1 = arith.constant 0 : i32
    return %c0_i32, %c0_i32_0 : i32, i32
  }
  func.func @transform_2(%arg0: i32) -> (i32, i32) {
    %c0_i32 = arith.constant 0 : i32
    %c0_i32_0 = arith.constant 0 : i32
    %c0_i32_1 = arith.constant 0 : i32
    return %c0_i32, %c0_i32_0 : i32, i32
  }
  func.func @transform_3(%arg0: i32) -> (i32, i32) {
    %c0_i32 = arith.constant 0 : i32
    %c0_i32_0 = arith.constant 0 : i32
    %c0_i32_1 = arith.constant 0 : i32
    return %c0_i32, %c0_i32_0 : i32, i32
  }
}

</mosaic_0001>

<llo_original>
// kernel: tpu_custom_call.1
$region0: #{tpu_custom_call.1}
  #allocation0 [shape = 'u32[]', space=smem, size = 0x4, offset = 0x4, fixed_abs, tag = 'smem constant byte address 0x4 - core index']
  #allocation1 [shape = 'u32[144,128]{1,0:T(1,128)}', space=vmem, size = 0x12000, scoped, tag = 'internal scratch']
  %s0 = inlined_call_operand.hbm [shape: f32[8,32], index: 0, kind: input, shape index: {}]
  %s1 = inlined_call_operand.vmem [shape: f32[1,32], index: 1, kind: input, shape index: {}]
  %s2 = inlined_call_operand.vmem [shape: f32[1,32], index: 2, kind: input, shape index: {}]
  %s3 = inlined_call_operand.hbm [shape: bf16[8,32], index: 3, kind: output, shape index: {}]
  %s4 = sld [smem:[#allocation0]]
  $region26: #{tpu_custom_call.1} parent=0
    _
  %s6 = ssub.s32 1, %s4
  %s7 = scalar_select 0, %s6, %s4
  $region1: #{tpu_custom_call.1} parent=0
    #allocation2 [shape = 'u8[4096]{0}', space=vmem, size = 0x1000, scoped, tag = 'input window, operand 0, single buffered']
    #allocation3 [shape = 's32[1]{0}', space=sflag, size = 0x4, scoped, tag = 'scoped memory for tpu_custom_call.1']
    #allocation4 [shape = 's32[1]{0}', space=sflag, size = 0x4, scoped, tag = 'scoped memory for tpu_custom_call.1']
    #allocation5 [shape = 'u8[2048]{0}', space=vmem, size = 0x800, scoped, tag = 'output window, operand 0, single buffered']
    %8 = vsyncpa [#allocation3], 0
    %9 = vsyncpa [#allocation4], 0
    // Predicated region
    $region2: #{tpu_custom_call.1} parent=1 // pred_check
      _
    $region3: #{tpu_custom_call.1} parent=1 // pred_check_branch
      %11 = sbr.rel (0) target = $region5
    $region4: #{tpu_custom_call.1} parent=1 // pred_region
      %s13 = ssub.s32 128, 128
      %14 = vsyncadd [#allocation3], %s13
      %s16 = sshll.u32 [#allocation2], 4
      %s17 = int_to_ptr.vmem [resolvable:$true] %s16
      %19 = dma.hbm_to_vmem [thread:$0]  %s0, 128, %s17, [#allocation3]
    $region5: #{tpu_custom_call.1} parent=1 // pred_fallthru
      _
    // Predicated region
    $region6: #{tpu_custom_call.1} parent=1 // pred_check
      _
    $region7: #{tpu_custom_call.1} parent=1 // pred_check_branch
      %21 = sbr.rel (0) target = $region9
    $region8: #{tpu_custom_call.1} parent=1 // pred_region
      _
    $region9: #{tpu_custom_call.1} parent=1 // pred_fallthru
      _
    // Predicated region
    $region10: #{tpu_custom_call.1} parent=1 // pred_check
      _
    $region11: #{tpu_custom_call.1} parent=1 // pred_check_branch
      %23 = sbr.rel (0) target = $region13
    $region12: #{tpu_custom_call.1} parent=1 // pred_region
      _
    $region13: #{tpu_custom_call.1} parent=1 // pred_fallthru
      _
    // Predicated region
    $region14: #{tpu_custom_call.1} parent=1 // pred_check
      _
    $region15: #{tpu_custom_call.1} parent=1 // pred_check_branch
      %25 = sbr.rel (0) target = $region17
    $region16: #{tpu_custom_call.1} parent=1 // pred_region
      %26 = dma.done [#allocation3], 128
    $region17: #{tpu_custom_call.1} parent=1 // pred_fallthru
      _
    %v27 = vld [vmem:[#allocation2] sm:$0xff]
    %vm28 = vcmask 261120
    %v29 = vsel %vm28, %v27, 0.0
    %v30 = vrot.slane %v29, 4
    %v31 = vadd.f32 %v29, %v30
    %v32 = vrot.slane %v31, 2
    %v33 = vadd.f32 %v31, %v32
    %v34 = vrot.slane %v33, 1
    %v35 = vadd.f32 %v33, %v34
    %v36 = vmul.f32 %v35, 0.125
    %v37 = vsub.f32 %v27, %v36
    %v38 = vmul.f32 %v37, %v37
    %v39 = vsel %vm28, %v38, 0.0
    %v40 = vrot.slane %v39, 4
    %v41 = vadd.f32 %v39, %v40
    %v42 = vrot.slane %v41, 2
    %v43 = vadd.f32 %v41, %v42
    %v44 = vrot.slane %v43, 1
    %v45 = vadd.f32 %v43, %v44
    %v46 = vmul.f32 %v45, 0.125
    %v47 = vld [vmem:[%s1] sm:$0x1]
    %v48 = vadd.f32 %v46, 1e-05
    %v49 = vrsqrt.pop %v48
    %v50 = vmul.f32 %v47, %v49
    %v52 = vlaneseq
    %v53 = vshrl.u32 %v52, 7
    %v54 = vsub.s32 0, %v53
    %v55 = vrot.slane %v50, %v54
    %v57 = vmul.f32 %v37, %v55
    %v58 = vld [vmem:[%s2] sm:$0x1]
    %v60 = vlaneseq
    %v61 = vshrl.u32 %v60, 7
    %v62 = vsub.s32 0, %v61
    %v63 = vrot.slane %v58, %v62
    %v65 = vadd.f32 %v57, %v63
    %v66 = vpack.c.bf16 %v65, %v65
    %vm67 = vcmask 257024
    %68 = vst.msk [vmem:[#allocation5] sm:$0xf] %vm67, %v66
    // Predicated region
    $region18: #{tpu_custom_call.1} parent=1 // pred_check
      _
    $region19: #{tpu_custom_call.1} parent=1 // pred_check_branch
      %70 = sbr.rel (0) target = $region21
    $region20: #{tpu_custom_call.1} parent=1 // pred_region
      %s72 = ssub.s32 64, 64
      %73 = vsyncadd [#allocation4], %s72
      %s75 = sshll.u32 [#allocation5], 4
      %s76 = int_to_ptr.vmem [resolvable:$true] %s75
      %78 = dma.vmem_to_hbm [thread:$0]  %s76, 64, %s3, [#allocation4]
    $region21: #{tpu_custom_call.1} parent=1 // pred_fallthru
      _
    // Predicated region
    $region22: #{tpu_custom_call.1} parent=1 // pred_check
      _
    $region23: #{tpu_custom_call.1} parent=1 // pred_check_branch
      %80 = sbr.rel (0) target = $region25
    $region24: #{tpu_custom_call.1} parent=1 // pred_region
      %81 = dma.done [#allocation4], 64
    $region25: #{tpu_custom_call.1} parent=1 // pred_fallthru
      _
    %82 = vsyncpa [#allocation3], 1
    %83 = vsyncpa [#allocation4], 1

</llo_original>
